<compile_context>
chip_gen: v6e
topology: v6e:2x2x1
jax: 0.10.0
libtpu: 0.0.40
codegen_flags: <defaults>
</compile_context>

<pallas_src>
import jax
import jax.numpy as jnp
from jax import lax
from jax.experimental import pallas as pl
from jax.experimental.pallas import tpu as pltpu

LANES = 128
SUBLANES = 8
MAX_BLOCK_ROWS = 2048  # (2048, 128) f32 block = 1 MiB per input per buffer


def _make_dice_partial_kernel(block_rows, blocks_per_split, blocks_total,
                              m_rows, need_mask):
    """Per-split partial reduction kernel (all closed-over values are Python ints)."""

    def kernel(p_ref, t_ref, o_ref, acc_ref):
        c = pl.program_id(0)   # split axis ("parallel" -> cores on v7x)
        i = pl.program_id(1)   # reduction step within the split

        @pl.when(i == 0)
        def _init():
            acc_ref[...] = jnp.zeros_like(acc_ref)

        p = p_ref[...].astype(jnp.float32)
        t = t_ref[...].astype(jnp.float32)

        if need_mask:
            # Zero rows past the real end of the data (ragged last block and/or
            # the single clamped out-of-bounds block slot).
            start = (c * blocks_per_split + i) * block_rows
            rows = lax.broadcasted_iota(jnp.int32, (block_rows, LANES), 0) + start
            valid = rows < m_rows
            p = jnp.where(valid, p, 0.0)
            t = jnp.where(valid, t, 0.0)

        # Fold the (block_rows, 128) tile into (8, 128) with pure VPU adds; all
        # cross-lane reductions are deferred to the tiny wrapper epilogue.
        acc_ref[0] += (p * t).reshape(-1, SUBLANES, LANES).sum(axis=0)
        acc_ref[1] += (p * p).reshape(-1, SUBLANES, LANES).sum(axis=0)
        acc_ref[2] += (t * t).reshape(-1, SUBLANES, LANES).sum(axis=0)

        @pl.when(i == pl.num_programs(1) - 1)
        def _finalize():
            o_ref[0] = acc_ref[...]

    return kernel


def dice_loss_pallas(preds, targets, smooth=1e-5):
    assert preds.shape == targets.shape
    smooth = float(smooth)  # plain Python scalar -> never captured as a tracer
    n = preds.size

    # Flatten in native dtype; pad with zeros only if needed so the row count
    # is a multiple of 8 (sublane granularity).
    p_flat = preds.reshape(-1)
    t_flat = targets.reshape(-1)
    chunk = LANES * SUBLANES
    if n % chunk != 0:
        pad = chunk - n % chunk
        p_flat = jnp.pad(p_flat, (0, pad))
        t_flat = jnp.pad(t_flat, (0, pad))

    m_rows = p_flat.size // LANES
    p2d = p_flat.reshape(m_rows, LANES)
    t2d = t_flat.reshape(m_rows, LANES)

    block_rows = min(MAX_BLOCK_ROWS, m_rows)        # m_rows is a multiple of 8
    blocks_total = -(-m_rows // block_rows)
    splits = 2 if blocks_total >= 2 else 1          # v7x: 2 TCs; no-op elsewhere
    blocks_per_split = -(-blocks_total // splits)
    need_mask = (m_rows % block_rows != 0) or (splits * blocks_per_split != blocks_total)

    def in_map(c, i):
        # Clamp so the DMA never targets a fully out-of-bounds block; the
        # in-kernel mask zeroes any contribution from clamped / ragged rows.
        return (jnp.minimum(c * blocks_per_split + i, blocks_total - 1), 0)

    kernel = _make_dice_partial_kernel(block_rows, blocks_per_split,
                                       blocks_total, m_rows, need_mask)

    bytes_accessed = (p2d.size * p2d.dtype.itemsize
                      + t2d.size * t2d.dtype.itemsize
                      + splits * 3 * SUBLANES * LANES * 4)

    partials = pl.pallas_call(
        kernel,
        out_shape=jax.ShapeDtypeStruct((splits, 3, SUBLANES, LANES), jnp.float32),
        grid_spec=pltpu.PrefetchScalarGridSpec(
            num_scalar_prefetch=0,
            grid=(splits, blocks_per_split),
            in_specs=[
                pl.BlockSpec((block_rows, LANES), in_map),
                pl.BlockSpec((block_rows, LANES), in_map),
            ],
            out_specs=pl.BlockSpec((1, 3, SUBLANES, LANES),
                                   lambda c, i: (c, 0, 0, 0)),
            scratch_shapes=[pltpu.VMEM((3, SUBLANES, LANES), jnp.float32)],
        ),
        compiler_params=pltpu.CompilerParams(
            dimension_semantics=("parallel", "arbitrary")),
        cost_estimate=pl.CostEstimate(
            flops=6 * n, transcendentals=0, bytes_accessed=bytes_accessed),
    )(p2d, t2d)

    # Tiny epilogue: combine per-split partials and apply the dice formula.
    sums = jnp.sum(partials, axis=(0, 2, 3))    # (3,) f32
    intersection = sums[0]
    union = sums[1] + sums[2]
    dice = (2.0 * intersection + smooth) / (union + smooth)
    return 1.0 - dice


def dice_loss_ref(preds, targets, smooth=1e-5):
    p = preds.astype(jnp.float32)
    t = targets.astype(jnp.float32)
    intersection = jnp.sum(p * t)
    union = jnp.sum(p * p) + jnp.sum(t * t)
    dice = (2.0 * intersection + smooth) / (union + smooth)
    return 1.0 - dice


if __name__ == "__main__":
    key = jax.random.PRNGKey(0)
    k1, k2 = jax.random.split(key)
    # NCHW, small shapes: batch=2, channels=4, spatial=16
    preds = jax.nn.sigmoid(jax.random.normal(k1, (2, 4, 16, 16), jnp.float32))
    targets = (jax.random.uniform(k2, (2, 4, 16, 16)) > 0.5).astype(jnp.float32)

    loss = dice_loss_pallas(preds, targets)
    jax.block_until_ready(loss)

    ref = dice_loss_ref(preds, targets)
    assert jnp.allclose(loss, ref, rtol=1e-5, atol=1e-6), (loss, ref)
    print("KERNEL_OK")
</pallas_src>

<mosaic_0001>
module attributes {stable_mosaic.version = 11 : i64} {
  func.func @kernel(%arg0: i32, %arg1: i32, %arg2: memref<16x128xf32, #tpu.memory_space<vmem>>, %arg3: memref<16x128xf32, #tpu.memory_space<vmem>>, %arg4: memref<1x3x8x128xf32, #tpu.memory_space<vmem>>, %arg5: memref<3x8x128xf32, #tpu.memory_space<vmem>>) attributes {dimension_semantics = [#tpu.dimension_semantics<parallel>, #tpu.dimension_semantics<arbitrary>], iteration_bounds = array<i64: 1, 1>, scalar_prefetch = 0 : i64, scratch_operands = 1 : i64, tpu.core_type = #tpu.core_type<tc>, window_params = [{transform_indices = @transform_0, window_bounds = array<i64: 16, 128>}, {transform_indices = @transform_1, window_bounds = array<i64: 16, 128>}, {transform_indices = @transform_2, window_bounds = array<i64: 1, 3, 8, 128>}]} {
    %c0_i32 = arith.constant 0 : i32
    %0 = arith.cmpi eq, %arg1, %c0_i32 : i32
    %1 = arith.extui %0 : i1 to i32
    %c0_i32_0 = arith.constant 0 : i32
    %2 = arith.cmpi ne, %1, %c0_i32_0 : i32
    scf.if %2 {
      %cst_24 = arith.constant 0.000000e+00 : f32
      %35 = vector.broadcast %cst_24 : f32 to vector<3x8x128xf32>
      %c0_25 = arith.constant 0 : index
      %c0_26 = arith.constant 0 : index
      %c0_27 = arith.constant 0 : index
      %36 = vector.load %arg5[%c0_25, %c0_26, %c0_27] : memref<3x8x128xf32, #tpu.memory_space<vmem>>, vector<3x8x128xf32>
      tpu.vector_store %arg5[%c0_25, %c0_26, %c0_27], %35 {strides = array<i32>} : memref<3x8x128xf32, #tpu.memory_space<vmem>>, vector<3x8x128xf32>,
    } else {
    }
    %c0 = arith.constant 0 : index
    %c0_1 = arith.constant 0 : index
    %3 = vector.load %arg2[%c0, %c0_1] : memref<16x128xf32, #tpu.memory_space<vmem>>, vector<16x128xf32>
    %c0_2 = arith.constant 0 : index
    %c0_3 = arith.constant 0 : index
    %4 = vector.load %arg3[%c0_2, %c0_3] : memref<16x128xf32, #tpu.memory_space<vmem>>, vector<16x128xf32>
    %c0_4 = arith.constant 0 : index
    %c0_5 = arith.constant 0 : index
    %c0_6 = arith.constant 0 : index
    %5 = vector.load %arg5[%c0_4, %c0_5, %c0_6] : memref<3x8x128xf32, #tpu.memory_space<vmem>>, vector<1x8x128xf32>
    %6 = vector.shape_cast %5 : vector<1x8x128xf32> to vector<8x128xf32>
    %7 = arith.mulf %3, %4 : vector<16x128xf32>
    %8 = vector.shape_cast %7 : vector<16x128xf32> to vector<2x8x128xf32>
    %cst = arith.constant dense<0.000000e+00> : vector<8x128xf32>
    %9 = vector.multi_reduction <add>, %8, %cst [0] : vector<2x8x128xf32> to vector<8x128xf32>
    %10 = arith.addf %6, %9 : vector<8x128xf32>
    %c0_7 = arith.constant 0 : index
    %c0_8 = arith.constant 0 : index
    %c0_9 = arith.constant 0 : index
    %11 = vector.load %arg5[%c0_7, %c0_8, %c0_9] : memref<3x8x128xf32, #tpu.memory_space<vmem>>, vector<1x8x128xf32>
    %12 = vector.shape_cast %11 : vector<1x8x128xf32> to vector<8x128xf32>
    %13 = vector.shape_cast %10 : vector<8x128xf32> to vector<1x8x128xf32>
    tpu.vector_store %arg5[%c0_7, %c0_8, %c0_9], %13 {strides = array<i32>} : memref<3x8x128xf32, #tpu.memory_space<vmem>>, vector<1x8x128xf32>,
    %c1 = arith.constant 1 : index
    %c0_10 = arith.constant 0 : index
    %c0_11 = arith.constant 0 : index
    %14 = vector.load %arg5[%c1, %c0_10, %c0_11] : memref<3x8x128xf32, #tpu.memory_space<vmem>>, vector<1x8x128xf32>
    %15 = vector.shape_cast %14 : vector<1x8x128xf32> to vector<8x128xf32>
    %16 = arith.mulf %3, %3 : vector<16x128xf32>
    %17 = vector.shape_cast %16 : vector<16x128xf32> to vector<2x8x128xf32>
    %cst_12 = arith.constant dense<0.000000e+00> : vector<8x128xf32>
    %18 = vector.multi_reduction <add>, %17, %cst_12 [0] : vector<2x8x128xf32> to vector<8x128xf32>
    %19 = arith.addf %15, %18 : vector<8x128xf32>
    %c1_13 = arith.constant 1 : index
    %c0_14 = arith.constant 0 : index
    %c0_15 = arith.constant 0 : index
    %20 = vector.load %arg5[%c1_13, %c0_14, %c0_15] : memref<3x8x128xf32, #tpu.memory_space<vmem>>, vector<1x8x128xf32>
    %21 = vector.shape_cast %20 : vector<1x8x128xf32> to vector<8x128xf32>
    %22 = vector.shape_cast %19 : vector<8x128xf32> to vector<1x8x128xf32>
    tpu.vector_store %arg5[%c1_13, %c0_14, %c0_15], %22 {strides = array<i32>} : memref<3x8x128xf32, #tpu.memory_space<vmem>>, vector<1x8x128xf32>,
    %c2 = arith.constant 2 : index
    %c0_16 = arith.constant 0 : index
    %c0_17 = arith.constant 0 : index
    %23 = vector.load %arg5[%c2, %c0_16, %c0_17] : memref<3x8x128xf32, #tpu.memory_space<vmem>>, vector<1x8x128xf32>
    %24 = vector.shape_cast %23 : vector<1x8x128xf32> to vector<8x128xf32>
    %25 = arith.mulf %4, %4 : vector<16x128xf32>
    %26 = vector.shape_cast %25 : vector<16x128xf32> to vector<2x8x128xf32>
    %cst_18 = arith.constant dense<0.000000e+00> : vector<8x128xf32>
    %27 = vector.multi_reduction <add>, %26, %cst_18 [0] : vector<2x8x128xf32> to vector<8x128xf32>
    %28 = arith.addf %24, %27 : vector<8x128xf32>
    %c2_19 = arith.constant 2 : index
    %c0_20 = arith.constant 0 : index
    %c0_21 = arith.constant 0 : index
    %29 = vector.load %arg5[%c2_19, %c0_20, %c0_21] : memref<3x8x128xf32, #tpu.memory_space<vmem>>, vector<1x8x128xf32>
    %30 = vector.shape_cast %29 : vector<1x8x128xf32> to vector<8x128xf32>
    %31 = vector.shape_cast %28 : vector<8x128xf32> to vector<1x8x128xf32>
    tpu.vector_store %arg5[%c2_19, %c0_20, %c0_21], %31 {strides = array<i32>} : memref<3x8x128xf32, #tpu.memory_space<vmem>>, vector<1x8x128xf32>,
    %c0_i32_22 = arith.constant 0 : i32
    %32 = arith.cmpi eq, %arg1, %c0_i32_22 : i32
    %33 = arith.extui %32 : i1 to i32
    %c0_i32_23 = arith.constant 0 : i32
    %34 = arith.cmpi ne, %33, %c0_i32_23 : i32
    scf.if %34 {
      %c0_24 = arith.constant 0 : index
      %c0_25 = arith.constant 0 : index
      %c0_26 = arith.constant 0 : index
      %35 = vector.load %arg5[%c0_24, %c0_25, %c0_26] : memref<3x8x128xf32, #tpu.memory_space<vmem>>, vector<3x8x128xf32>
      %c0_27 = arith.constant 0 : index
      %c0_28 = arith.constant 0 : index
      %c0_29 = arith.constant 0 : index
      %c0_30 = arith.constant 0 : index
      %36 = vector.load %arg4[%c0_27, %c0_28, %c0_29, %c0_30] : memref<1x3x8x128xf32, #tpu.memory_space<vmem>>, vector<1x3x8x128xf32>
      %37 = vector.shape_cast %36 : vector<1x3x8x128xf32> to vector<3x8x128xf32>
      %38 = vector.shape_cast %35 : vector<3x8x128xf32> to vector<1x3x8x128xf32>
      tpu.vector_store %arg4[%c0_27, %c0_28, %c0_29, %c0_30], %38 {strides = array<i32>} : memref<1x3x8x128xf32, #tpu.memory_space<vmem>>, vector<1x3x8x128xf32>,
    } else {
    }
    return
  }
  func.func @transform_0(%arg0: i32, %arg1: i32) -> (i32, i32) {
    %c1_i32 = arith.constant 1 : i32
    %0 = arith.muli %arg0, %c1_i32 : i32
    %1 = arith.addi %0, %arg1 : i32
    %c0_i32 = arith.constant 0 : i32
    %2 = arith.minsi %1, %c0_i32 : i32
    %c0_i32_0 = arith.constant 0 : i32
    %c0_i32_1 = arith.constant 0 : i32
    return %2, %c0_i32_0 : i32, i32
  }
  func.func @transform_1(%arg0: i32, %arg1: i32) -> (i32, i32) {
    %c1_i32 = arith.constant 1 : i32
    %0 = arith.muli %arg0, %c1_i32 : i32
    %1 = arith.addi %0, %arg1 : i32
    %c0_i32 = arith.constant 0 : i32
    %2 = arith.minsi %1, %c0_i32 : i32
    %c0_i32_0 = arith.constant 0 : i32
    %c0_i32_1 = arith.constant 0 : i32
    return %2, %c0_i32_0 : i32, i32
  }
  func.func @transform_2(%arg0: i32, %arg1: i32) -> (i32, i32, i32, i32) {
    %c0_i32 = arith.constant 0 : i32
    %c0_i32_0 = arith.constant 0 : i32
    %c0_i32_1 = arith.constant 0 : i32
    %c0_i32_2 = arith.constant 0 : i32
    return %arg0, %c0_i32, %c0_i32_0, %c0_i32_1 : i32, i32, i32, i32
  }
}

</mosaic_0001>

<llo_original>
// kernel: tpu_custom_call.1
$region0: #{tpu_custom_call.1}
  #allocation0 [shape = 'u32[]', space=smem, size = 0x4, offset = 0x4, fixed_abs, tag = 'smem constant byte address 0x4 - core index']
  #allocation1 [shape = 'u32[144,128]{1,0:T(1,128)}', space=vmem, size = 0x12000, scoped, tag = 'internal scratch']
  #allocation2 [shape = 'f32[3,8,128]{2,1,0:T(8,128)}', space=vmem, size = 0x3000, scoped, tag = 'scratch operand']
  %s0 = inlined_call_operand.hbm [shape: f32[16,128], index: 0, kind: input, shape index: {}]
  %s1 = inlined_call_operand.hbm [shape: f32[16,128], index: 1, kind: input, shape index: {}]
  %s2 = inlined_call_operand.hbm [shape: f32[1,3,8,128], index: 2, kind: output, shape index: {}]
  %s3 = sld [smem:[#allocation0]]
  $region34: #{tpu_custom_call.1} parent=0
    _
  %s5 = ssub.s32 1, %s3
  %s6 = scalar_select 0, %s5, %s3
  $region1: #{tpu_custom_call.1} parent=0
    #allocation3 [shape = 'u8[8192]{0}', space=vmem, size = 0x2000, scoped, tag = 'input window, operand 0, single buffered']
    #allocation4 [shape = 's32[1]{0}', space=sflag, size = 0x4, scoped, tag = 'scoped memory for tpu_custom_call.1']
    #allocation5 [shape = 's32[1]{0}', space=sflag, size = 0x4, scoped, tag = 'scoped memory for tpu_custom_call.1']
    #allocation6 [shape = 'u8[8192]{0}', space=vmem, size = 0x2000, scoped, tag = 'input window, operand 1, single buffered']
    #allocation7 [shape = 's32[1]{0}', space=sflag, size = 0x4, scoped, tag = 'scoped memory for tpu_custom_call.1']
    #allocation8 [shape = 'u8[12288]{0}', space=vmem, size = 0x3000, scoped, tag = 'output window, operand 0, single buffered']
    %7 = vsyncpa [#allocation4], 0
    %8 = vsyncpa [#allocation7], 0
    %9 = vsyncpa [#allocation5], 0
    // Predicated region
    $region2: #{tpu_custom_call.1} parent=1 // pred_check
      _
    $region3: #{tpu_custom_call.1} parent=1 // pred_check_branch
      %11 = sbr.rel (0) target = $region5
    $region4: #{tpu_custom_call.1} parent=1 // pred_region
      %s12 = sadd.s32 0, 0
      %p13 = scmp.lt.s32.totalorder %s12, 0
      %s14 = scalar_select %p13, %s12, 0
      %s15 = smul.u32 2, %s14
      %s17 = ssub.s32 256, 256
      %18 = vsyncadd [#allocation4], %s17
      %s19 = smul.addr %s15, 128
      %s20 = scalar_lea.hbm %s0, %s19
      %s21 = sshll.u32 [#allocation3], 4
      %s22 = int_to_ptr.vmem [resolvable:$true] %s21
      %27 = dma.hbm_to_vmem [thread:$0]  %s20, 256, %s22, [#allocation4], 128, 128, 8
    $region5: #{tpu_custom_call.1} parent=1 // pred_fallthru
      _
    // Predicated region
    $region6: #{tpu_custom_call.1} parent=1 // pred_check
      _
    $region7: #{tpu_custom_call.1} parent=1 // pred_check_branch
      %29 = sbr.rel (0) target = $region9
    $region8: #{tpu_custom_call.1} parent=1 // pred_region
      %s30 = sadd.s32 0, 0
      %p31 = scmp.lt.s32.totalorder %s30, 0
      %s32 = scalar_select %p31, %s30, 0
      %s33 = smul.u32 2, %s32
      %s35 = ssub.s32 256, 256
      %36 = vsyncadd [#allocation7], %s35
      %s37 = smul.addr %s33, 128
      %s38 = scalar_lea.hbm %s1, %s37
      %s39 = sshll.u32 [#allocation6], 4
      %s40 = int_to_ptr.vmem [resolvable:$true] %s39
      %45 = dma.hbm_to_vmem [thread:$0]  %s38, 256, %s40, [#allocation7], 128, 128, 8
    $region9: #{tpu_custom_call.1} parent=1 // pred_fallthru
      _
    // Predicated region
    $region10: #{tpu_custom_call.1} parent=1 // pred_check
      _
    $region11: #{tpu_custom_call.1} parent=1 // pred_check_branch
      %47 = sbr.rel (0) target = $region13
    $region12: #{tpu_custom_call.1} parent=1 // pred_region
      %48 = dma.done [#allocation4], 256
    $region13: #{tpu_custom_call.1} parent=1 // pred_fallthru
      _
    // Predicated region
    $region14: #{tpu_custom_call.1} parent=1 // pred_check
      _
    $region15: #{tpu_custom_call.1} parent=1 // pred_check_branch
      %50 = sbr.rel (0) target = $region17
    $region16: #{tpu_custom_call.1} parent=1 // pred_region
      %51 = dma.done [#allocation7], 256
    $region17: #{tpu_custom_call.1} parent=1 // pred_fallthru
      _
    %s52 = sadd.s32 0, 0
    %p53 = scmp.lt.s32.totalorder %s52, 0
    %s54 = scalar_select %p53, %s52, 0
    %s55 = smul.u32 2, %s54
    %s56 = sadd.s32 0, 0
    %p57 = scmp.lt.s32.totalorder %s56, 0
    %s58 = scalar_select %p57, %s56, 0
    %s59 = smul.u32 2, %s58
    %p60 = scmp.eq.s32.totalorder 0, 0
    // Predicated region
    $region18: #{tpu_custom_call.1} parent=1 // pred_check
      %p61 = pneg %p60
    $region19: #{tpu_custom_call.1} parent=1 // pred_check_branch
      %63 = sbr.rel (%p61) target = $region21
    $region20: #{tpu_custom_call.1} parent=1 // pred_region
      %64 = vst [vmem:[#allocation2] sm:$0xff] 0.0
      %65 = vst [vmem:[#allocation2 + $0x8] sm:$0xff] 0.0
      %66 = vst [vmem:[#allocation2 + $0x10] sm:$0xff] 0.0
    $region21: #{tpu_custom_call.1} parent=1 // pred_fallthru
      _
    %v67 = vld [vmem:[#allocation3] sm:$0xff]
    %v68 = vld [vmem:[#allocation3 + $0x8] sm:$0xff]
    %v69 = vld [vmem:[#allocation6] sm:$0xff]
    %v70 = vld [vmem:[#allocation6 + $0x8] sm:$0xff]
    %v71 = vld [vmem:[#allocation2] sm:$0xff]
    %v72 = vmul.f32 %v67, %v69
    %v73 = vmul.f32 %v68, %v70
    %v74 = vadd.f32 %v72, %v73
    %v75 = vadd.f32 %v71, %v74
    %76 = vst [vmem:[#allocation2] sm:$0xff] %v75
    %s77 = scalar_lea.vmem [#allocation2], 8
    %v78 = vld [vmem:[%s77] sm:$0xff]
    %v79 = vmul.f32 %v67, %v67
    %v80 = vmul.f32 %v68, %v68
    %v81 = vadd.f32 %v79, %v80
    %v82 = vadd.f32 %v78, %v81
    %83 = vst [vmem:[%s77] sm:$0xff] %v82
    %s84 = scalar_lea.vmem [#allocation2], 16
    %v85 = vld [vmem:[%s84] sm:$0xff]
    %v86 = vmul.f32 %v69, %v69
    %v87 = vmul.f32 %v70, %v70
    %v88 = vadd.f32 %v86, %v87
    %v89 = vadd.f32 %v85, %v88
    %90 = vst [vmem:[%s84] sm:$0xff] %v89
    // Predicated region
    $region22: #{tpu_custom_call.1} parent=1 // pred_check
      %p91 = pneg %p60
    $region23: #{tpu_custom_call.1} parent=1 // pred_check_branch
      %93 = sbr.rel (%p91) target = $region25
    $region24: #{tpu_custom_call.1} parent=1 // pred_region
      %v94 = vld [vmem:[#allocation2] sm:$0xff]
      %v95 = vld [vmem:[#allocation2 + $0x8] sm:$0xff]
      %v96 = vld [vmem:[#allocation2 + $0x10] sm:$0xff]
      %97 = vst [vmem:[#allocation8] sm:$0xff] %v94
      %98 = vst [vmem:[#allocation8 + $0x8] sm:$0xff] %v95
      %99 = vst [vmem:[#allocation8 + $0x10] sm:$0xff] %v96
    $region25: #{tpu_custom_call.1} parent=1 // pred_fallthru
      _
    // Predicated region
    $region26: #{tpu_custom_call.1} parent=1 // pred_check
      _
    $region27: #{tpu_custom_call.1} parent=1 // pred_check_branch
      %101 = sbr.rel (0) target = $region29
    $region28: #{tpu_custom_call.1} parent=1 // pred_region
      %s103 = ssub.s32 384, 384
      %104 = vsyncadd [#allocation5], %s103
      %s105 = sshll.u32 [#allocation8], 4
      %s106 = int_to_ptr.vmem [resolvable:$true] %s105
      %111 = dma.vmem_to_hbm [thread:$0]  %s106, 384, %s2, [#allocation5], 128, 128, 8
    $region29: #{tpu_custom_call.1} parent=1 // pred_fallthru
      _
    // Predicated region
    $region30: #{tpu_custom_call.1} parent=1 // pred_check
      _
    $region31: #{tpu_custom_call.1} parent=1 // pred_check_branch
      %113 = sbr.rel (0) target = $region33
    $region32: #{tpu_custom_call.1} parent=1 // pred_region
      %114 = dma.done [#allocation5], 384
    $region33: #{tpu_custom_call.1} parent=1 // pred_fallthru
      _
    %115 = vsyncpa [#allocation4], 1
    %116 = vsyncpa [#allocation7], 1
    %117 = vsyncpa [#allocation5], 1

</llo_original>
